<compile_context>
chip_gen: v6e
topology: v6e:2x2x1
jax: 0.10.0
libtpu: 0.0.40
codegen_flags: <defaults>
</compile_context>

<pallas_src>
import functools
import math

import jax
import jax.numpy as jnp
from jax.experimental import pallas as pl
from jax.experimental.pallas import tpu as pltpu
from jax.scipy.special import erf as _host_erf  # host-side reference only

EPS = 1e-5
MOMENTUM = 0.99
_SQRT_2_OVER_PI = math.sqrt(2.0 / math.pi)
_PHI_C = 0.044715

# Training uses a single fused kernel with z resident in VMEM when B*F*4 is at most this.
_FUSED_Z_BYTES = 2 * 2**20
# ~12 tile-sized live f32 buffers: z (x2 DMA), out (x2), y/theta, sin, cos, prefix, iota, temps.
_LIVE_TILE_COPIES = 12
_TARGET_TILE_BYTES = 2 * 2**20  # per-copy tile budget -> ~24 MiB working set (v7x-safe)


def _phi(y):
    """Standard-normal CDF Phi(y) via the tanh (GELU-style) approximation.

    One EUP push (tanh) per element instead of exp + reciprocal + sign/abs/poly VPU work;
    |error| ~ 1e-3, which is the documented / intended precision of this layer.
    """
    return 0.5 * (1.0 + jnp.tanh(_SQRT_2_OVER_PI * (y + _PHI_C * y * y * y)))


def _euler_encode_store(z, scale, bias, out_ref):
    """Folded stretch affine -> Phi -> euler encoding; stores the (tb, F+1) output tile."""
    feat = z.shape[-1]
    y = scale * z + bias                 # folded normalization: one mul + one add / element
    theta = _phi(y)                      # gaussian_interpolation
    cos_t = jnp.cos(theta)
    sin_t = jnp.sin(theta)

    # Exclusive prefix product of sin(theta) along the lane axis with a multiplicative
    # Hillis-Steele scan (pltpu.roll on the XLU).  For F > 128 (divisible by 128) the scan
    # is segmented per 128-lane vreg segment and a tiny static carry loop stitches the
    # segments, so no roll ever carries useful data across a vreg boundary.
    use_segments = feat > 128 and feat % 128 == 0
    seg = 128 if use_segments else feat
    lane = jax.lax.broadcasted_iota(jnp.int32, sin_t.shape, sin_t.ndim - 1)
    pos = lane % seg if use_segments else lane

    def shift_in_ones(v, s):
        return jnp.where(pos >= s, pltpu.roll(v, s, axis=v.ndim - 1), 1.0)

    prod_excl = shift_in_ones(sin_t, 1)          # seed: [1, sin0, sin1, ...] per segment
    step = 1
    while step < seg:                            # static unroll: ceil(log2(seg)) steps
        prod_excl = prod_excl * shift_in_ones(prod_excl, step)
        step *= 2

    if use_segments:
        incl = prod_excl * sin_t                 # inclusive within-segment prefix product
        carry = jnp.ones((z.shape[0], 1), z.dtype)
        for k in range(feat // seg):             # static loop over segments
            lo = k * seg
            out_ref[:, lo:lo + seg] = (
                cos_t[:, lo:lo + seg] * (prod_excl[:, lo:lo + seg] * carry))
            carry = carry * incl[:, lo + seg - 1:lo + seg]
        out_ref[:, feat:feat + 1] = carry        # prod_j sin(theta_j)
    else:
        out_ref[:, :feat] = cos_t * prod_excl
        out_ref[:, feat:feat + 1] = prod_excl[:, feat - 1:feat] * sin_t[:, feat - 1:feat]


# ---------------------------------------------------------------------------
# Fused training kernel (z resident in a single VMEM block): full-batch stats,
# moving-buffer update, and the main pass -- z is read from HBM exactly once.
# ---------------------------------------------------------------------------
def _dae_fused_train_kernel(z_ref, mmag_ref, mmin_ref, ag_ref, beta_ref,
                            out_ref, nmag_ref, nmin_ref):
    z = z_ref[...]
    mn = jnp.min(z, axis=0, keepdims=True)
    mag = jnp.max(z, axis=0, keepdims=True) - mn
    nmag_ref[...] = MOMENTUM * mmag_ref[...] + (1.0 - MOMENTUM) * mag
    nmin_ref[...] = MOMENTUM * mmin_ref[...] + (1.0 - MOMENTUM) * mn
    scale = ag_ref[...] / (mag + EPS)            # (1, F) work: exact divide is free here
    bias = beta_ref[...] - scale * mn
    _euler_encode_store(z, scale, bias, out_ref)


# ---------------------------------------------------------------------------
# Streaming stats kernel (training, large batches): full-batch per-feature min / magnitude
# reduced over an "arbitrary" grid axis into VMEM scratch; the updated moving buffers AND
# the folded per-feature scale/bias are produced once, on the last step, under pl.when --
# tiling the batch never produces per-tile statistics.
# ---------------------------------------------------------------------------
def _stats_kernel(z_ref, mmag_ref, mmin_ref, ag_ref, beta_ref,
                  nmag_ref, nmin_ref, scale_ref, bias_ref, rmin_ref, rmax_ref):
    i = pl.program_id(0)
    x = z_ref[...]
    tile_mn = jnp.min(x, axis=0, keepdims=True)
    tile_mx = jnp.max(x, axis=0, keepdims=True)

    @pl.when(i == 0)
    def _():
        rmin_ref[...] = tile_mn
        rmax_ref[...] = tile_mx

    @pl.when(i > 0)
    def _():
        rmin_ref[...] = jnp.minimum(rmin_ref[...], tile_mn)
        rmax_ref[...] = jnp.maximum(rmax_ref[...], tile_mx)

    @pl.when(i == pl.num_programs(0) - 1)
    def _():
        mn = rmin_ref[...]
        mag = rmax_ref[...] - mn
        nmag_ref[...] = MOMENTUM * mmag_ref[...] + (1.0 - MOMENTUM) * mag
        nmin_ref[...] = MOMENTUM * mmin_ref[...] + (1.0 - MOMENTUM) * mn
        scale = ag_ref[...] / (mag + EPS)
        scale_ref[...] = scale
        bias_ref[...] = beta_ref[...] - scale * mn


# ---------------------------------------------------------------------------
# Main kernel: folded affine -> Phi -> euler encoding on one batch tile.
# ---------------------------------------------------------------------------
def _dae_main_kernel(z_ref, scale_ref, bias_ref, out_ref):
    _euler_encode_store(z_ref[...], scale_ref[...], bias_ref[...], out_ref)


def _batch_tile(batch, feat):
    """F-aware, VMEM-budgeted batch tile: a multiple of 8 that divides the batch."""
    if batch <= 8:
        return batch
    tb_budget = max(8, (_TARGET_TILE_BYTES // (4 * feat)) // 8 * 8)
    # Keep at least ~8 grid steps when the batch allows it, so v7x's two TensorCores and
    # BlockSpec double-buffering both have work (grid=(1,) disables both).
    tb_steps = max(8, (batch // 8) // 8 * 8)
    limit = min(1024, tb_budget, tb_steps)
    best = 0
    t = 8
    while t <= limit:
        if batch % t == 0:
            best = t
        t += 8
    return best if best else batch  # odd batch sizes: fall back to a single full block


def _compiler_params(semantics, tile_bytes):
    kwargs = {}
    need = _LIVE_TILE_COPIES * tile_bytes
    if need > 16 * 2**20:
        # Default scoped VMEM is 16 MiB (v5e) / 32 MiB (v6e, v7x); cap the request at
        # 32 MiB so v7x (64 MiB physical per TC) keeps headroom for pipeline buffers.
        kwargs["vmem_limit_bytes"] = int(min(need, 32 * 2**20))
    return pltpu.CompilerParams(dimension_semantics=semantics, **kwargs)


@functools.partial(jax.jit, static_argnames=("training",))
def dae_layer_forward(z, gamma, beta, alpha, moving_mag, moving_min, *, training=True):
    B, F = z.shape
    ag = alpha * gamma                                   # tiny (1, F) XLA op
    out_shape = jax.ShapeDtypeStruct((B, F + 1), jnp.float32)
    vec_shape = jax.ShapeDtypeStruct((1, F), jnp.float32)

    if training and B * F * 4 <= _FUSED_Z_BYTES:
        # Single fused kernel: stats + moving-buffer update + main pass; z read once.
        full_in = pl.BlockSpec((B, F), lambda i: (0, 0))
        full_out = pl.BlockSpec((B, F + 1), lambda i: (0, 0))
        vec = pl.BlockSpec((1, F), lambda i: (0, 0))
        s, new_mag, new_min = pl.pallas_call(
            _dae_fused_train_kernel,
            out_shape=(out_shape, vec_shape, vec_shape),
            grid=(1,),
            in_specs=[full_in, vec, vec, vec, vec],
            out_specs=(full_out, vec, vec),
            compiler_params=_compiler_params(("arbitrary",), B * (F + 1) * 4),
        )(z, moving_mag, moving_min, ag, beta)
        return s, new_mag, new_min

    tb = _batch_tile(B, F)
    grid = (B // tb,)
    row_in = pl.BlockSpec((tb, F), lambda i: (i, 0))
    row_out = pl.BlockSpec((tb, F + 1), lambda i: (i, 0))
    vec = pl.BlockSpec((1, F), lambda i: (0, 0))
    tile_bytes = tb * (F + 1) * 4

    if training:
        # Pass 1: full-batch stats -> updated moving buffers + folded per-feature scale/bias.
        # TODO(synk): on v7x this reduction could also be split across the two TensorCores
        #             with a size-2 "parallel" leading grid axis and a 2-row partial output.
        new_mag, new_min, scale, bias = pl.pallas_call(
            _stats_kernel,
            out_shape=(vec_shape,) * 4,
            grid=grid,
            in_specs=[row_in, vec, vec, vec, vec],
            out_specs=(vec, vec, vec, vec),
            scratch_shapes=[pltpu.VMEM((1, F), jnp.float32),
                            pltpu.VMEM((1, F), jnp.float32)],
            compiler_params=_compiler_params(("arbitrary",), tb * F * 4),
        )(z, moving_mag, moving_min, ag, beta)
    else:
        # Eval: fold the moving statistics into scale/bias with a tiny XLA op; the moving
        # buffers are returned unchanged (no kernel round trip).
        scale = ag / (moving_mag + EPS)
        bias = beta - scale * moving_min
        new_mag, new_min = moving_mag, moving_min

    # Pass 2: elementwise + scan, batch streamed over a "parallel" grid axis, single fused
    # lane-dense (B, F+1) output (no XLA concat afterwards).
    s = pl.pallas_call(
        _dae_main_kernel,
        out_shape=out_shape,
        grid=grid,
        in_specs=[row_in, vec, vec],
        out_specs=row_out,
        compiler_params=_compiler_params(("parallel",), tile_bytes),
    )(z, scale, bias)
    return s, new_mag, new_min


if __name__ == "__main__":
    B, F = 8, 16   # batch, latent dims (num_features)

    key = jax.random.PRNGKey(0)
    kz, kg, kb = jax.random.split(key, 3)
    z = jax.random.normal(kz, (B, F), dtype=jnp.float32)

    # Parameter / buffer shapes as in Stretch.__init__ (num_dims == 2).  gamma/beta are
    # (deterministically) randomized so the numerical check exercises varied angles.
    gamma = 0.15 * (2.0 * jax.random.uniform(kg, (1, F), dtype=jnp.float32) - 1.0)
    beta = jax.random.uniform(kb, (1, F), dtype=jnp.float32, minval=0.2, maxval=2.8)
    moving_mag = jnp.ones((1, F), dtype=jnp.float32)
    moving_min = math.pi * jnp.ones((1, F), dtype=jnp.float32)
    # alpha: per-dim angular range (pi for all but the last dim, 2*pi for the last).
    alpha = jnp.concatenate(
        [math.pi * jnp.ones((1, F - 1), dtype=jnp.float32),
         2.0 * math.pi * jnp.ones((1, 1), dtype=jnp.float32)], axis=-1)

    # Pure-JAX reference of the same forward semantics (exact erf CDF).
    def reference(z, gamma, beta, alpha, mmag, mmin, training):
        if training:
            mn = jnp.min(z, axis=0, keepdims=True)
            mag = jnp.max(z, axis=0, keepdims=True) - mn
            nmag = MOMENTUM * mmag + (1.0 - MOMENTUM) * mag
            nmin = MOMENTUM * mmin + (1.0 - MOMENTUM) * mn
        else:
            mn, mag, nmag, nmin = mmin, mmag, mmag, mmin
        y = alpha * gamma * ((z - mn) / (mag + EPS)) + beta
        theta = 0.5 * (1.0 + _host_erf(y / jnp.sqrt(2.0)))
        sin_t, cos_t = jnp.sin(theta), jnp.cos(theta)
        excl = jnp.concatenate(
            [jnp.ones((z.shape[0], 1), z.dtype), jnp.cumprod(sin_t[:, :-1], axis=-1)],
            axis=-1)
        out = jnp.concatenate(
            [cos_t * excl, jnp.cumprod(sin_t, axis=-1)[:, -1:]], axis=-1)
        return out, nmag, nmin

    # Training pass (fused z-resident kernel; updates the moving buffers).
    s, new_mag, new_min = dae_layer_forward(
        z, gamma, beta, alpha, moving_mag, moving_min, training=True)
    jax.block_until_ready((s, new_mag, new_min))

    ref_s, ref_mag, ref_min = reference(z, gamma, beta, alpha, moving_mag, moving_min, True)
    assert s.shape == (B, F + 1)
    assert bool(jnp.all(jnp.isfinite(s)))
    # Loose tolerance covers the tanh-based Phi approximation (|err| ~ 1e-3).
    assert float(jnp.max(jnp.abs(s - ref_s))) < 1e-1
    assert float(jnp.max(jnp.abs(new_mag - ref_mag))) < 1e-5
    assert float(jnp.max(jnp.abs(new_min - ref_min))) < 1e-5

    # Eval pass (moving statistics folded to scale/bias; buffers pass through untouched).
    s_eval, eval_mag, eval_min = dae_layer_forward(
        z, gamma, beta, alpha, moving_mag, moving_min, training=False)
    jax.block_until_ready((s_eval, eval_mag, eval_min))
    ref_eval, _, _ = reference(z, gamma, beta, alpha, moving_mag, moving_min, False)
    assert s_eval.shape == (B, F + 1)
    assert bool(jnp.all(jnp.isfinite(s_eval)))
    assert float(jnp.max(jnp.abs(s_eval - ref_eval))) < 1e-1

    print("KERNEL_OK")
</pallas_src>

<mosaic_0001>
module attributes {stable_mosaic.version = 11 : i64} {
  func.func @_dae_fused_train_kernel(%arg0: i32, %arg1: memref<8x16xf32, #tpu.memory_space<vmem>>, %arg2: memref<1x16xf32, #tpu.memory_space<vmem>>, %arg3: memref<1x16xf32, #tpu.memory_space<vmem>>, %arg4: memref<1x16xf32, #tpu.memory_space<vmem>>, %arg5: memref<1x16xf32, #tpu.memory_space<vmem>>, %arg6: memref<8x17xf32, #tpu.memory_space<vmem>>, %arg7: memref<1x16xf32, #tpu.memory_space<vmem>>, %arg8: memref<1x16xf32, #tpu.memory_space<vmem>>) attributes {dimension_semantics = [#tpu.dimension_semantics<arbitrary>], iteration_bounds = array<i64: 1>, scalar_prefetch = 0 : i64, scratch_operands = 0 : i64, tpu.core_type = #tpu.core_type<tc>, window_params = [{pipeline_mode = #tpu.pipeline_mode<synchronous>, transform_indices = @transform_0, window_bounds = array<i64: 8, 16>}, {pipeline_mode = #tpu.pipeline_mode<synchronous>, transform_indices = @transform_1, window_bounds = array<i64: 1, 16>}, {pipeline_mode = #tpu.pipeline_mode<synchronous>, transform_indices = @transform_2, window_bounds = array<i64: 1, 16>}, {pipeline_mode = #tpu.pipeline_mode<synchronous>, transform_indices = @transform_3, window_bounds = array<i64: 1, 16>}, {pipeline_mode = #tpu.pipeline_mode<synchronous>, transform_indices = @transform_4, window_bounds = array<i64: 1, 16>}, {pipeline_mode = #tpu.pipeline_mode<synchronous>, transform_indices = @transform_5, window_bounds = array<i64: 8, 17>}, {pipeline_mode = #tpu.pipeline_mode<synchronous>, transform_indices = @transform_6, window_bounds = array<i64: 1, 16>}, {pipeline_mode = #tpu.pipeline_mode<synchronous>, transform_indices = @transform_7, window_bounds = array<i64: 1, 16>}]} {
    %c0 = arith.constant 0 : index
    %c0_0 = arith.constant 0 : index
    %0 = vector.load %arg1[%c0, %c0_0] : memref<8x16xf32, #tpu.memory_space<vmem>>, vector<8x16xf32>
    %cst = arith.constant dense<0x7F800000> : vector<16xf32>
    %1 = vector.multi_reduction <minimumf>, %0, %cst [0] : vector<8x16xf32> to vector<16xf32>
    %2 = vector.shape_cast %1 : vector<16xf32> to vector<1x16xf32>
    %cst_1 = arith.constant dense<0xFF800000> : vector<16xf32>
    %3 = vector.multi_reduction <maximumf>, %0, %cst_1 [0] : vector<8x16xf32> to vector<16xf32>
    %4 = vector.shape_cast %3 : vector<16xf32> to vector<1x16xf32>
    %5 = arith.subf %4, %2 : vector<1x16xf32>
    %c0_2 = arith.constant 0 : index
    %c0_3 = arith.constant 0 : index
    %6 = vector.load %arg2[%c0_2, %c0_3] : memref<1x16xf32, #tpu.memory_space<vmem>>, vector<1x16xf32>
    %cst_4 = arith.constant 9.900000e-01 : f32
    %7 = vector.broadcast %cst_4 : f32 to vector<1x16xf32>
    %8 = arith.mulf %7, %6 : vector<1x16xf32>
    %cst_5 = arith.constant 0.00999999977 : f32
    %9 = vector.broadcast %cst_5 : f32 to vector<1x16xf32>
    %10 = arith.mulf %9, %5 : vector<1x16xf32>
    %11 = arith.addf %8, %10 : vector<1x16xf32>
    %c0_6 = arith.constant 0 : index
    %c0_7 = arith.constant 0 : index
    %12 = vector.load %arg7[%c0_6, %c0_7] : memref<1x16xf32, #tpu.memory_space<vmem>>, vector<1x16xf32>
    tpu.vector_store %arg7[%c0_6, %c0_7], %11 {strides = array<i32>} : memref<1x16xf32, #tpu.memory_space<vmem>>, vector<1x16xf32>,
    %c0_8 = arith.constant 0 : index
    %c0_9 = arith.constant 0 : index
    %13 = vector.load %arg3[%c0_8, %c0_9] : memref<1x16xf32, #tpu.memory_space<vmem>>, vector<1x16xf32>
    %cst_10 = arith.constant 9.900000e-01 : f32
    %14 = vector.broadcast %cst_10 : f32 to vector<1x16xf32>
    %15 = arith.mulf %14, %13 : vector<1x16xf32>
    %cst_11 = arith.constant 0.00999999977 : f32
    %16 = vector.broadcast %cst_11 : f32 to vector<1x16xf32>
    %17 = arith.mulf %16, %2 : vector<1x16xf32>
    %18 = arith.addf %15, %17 : vector<1x16xf32>
    %c0_12 = arith.constant 0 : index
    %c0_13 = arith.constant 0 : index
    %19 = vector.load %arg8[%c0_12, %c0_13] : memref<1x16xf32, #tpu.memory_space<vmem>>, vector<1x16xf32>
    tpu.vector_store %arg8[%c0_12, %c0_13], %18 {strides = array<i32>} : memref<1x16xf32, #tpu.memory_space<vmem>>, vector<1x16xf32>,
    %c0_14 = arith.constant 0 : index
    %c0_15 = arith.constant 0 : index
    %20 = vector.load %arg4[%c0_14, %c0_15] : memref<1x16xf32, #tpu.memory_space<vmem>>, vector<1x16xf32>
    %cst_16 = arith.constant 9.99999974E-6 : f32
    %21 = vector.broadcast %cst_16 : f32 to vector<1x16xf32>
    %22 = arith.addf %5, %21 : vector<1x16xf32>
    %23 = arith.divf %20, %22 : vector<1x16xf32>
    %c0_17 = arith.constant 0 : index
    %c0_18 = arith.constant 0 : index
    %24 = vector.load %arg5[%c0_17, %c0_18] : memref<1x16xf32, #tpu.memory_space<vmem>>, vector<1x16xf32>
    %25 = arith.mulf %23, %2 : vector<1x16xf32>
    %26 = arith.subf %24, %25 : vector<1x16xf32>
    %27 = vector.broadcast %23 : vector<1x16xf32> to vector<8x16xf32>
    %28 = arith.mulf %27, %0 : vector<8x16xf32>
    %29 = vector.broadcast %26 : vector<1x16xf32> to vector<8x16xf32>
    %30 = arith.addf %28, %29 : vector<8x16xf32>
    %cst_19 = arith.constant 4.471500e-02 : f32
    %31 = vector.broadcast %cst_19 : f32 to vector<8x16xf32>
    %32 = arith.mulf %31, %30 : vector<8x16xf32>
    %33 = arith.mulf %32, %30 : vector<8x16xf32>
    %34 = arith.mulf %33, %30 : vector<8x16xf32>
    %35 = arith.addf %30, %34 : vector<8x16xf32>
    %cst_20 = arith.constant 0.797884583 : f32
    %36 = vector.broadcast %cst_20 : f32 to vector<8x16xf32>
    %37 = arith.mulf %36, %35 : vector<8x16xf32>
    %38 = math.tanh %37 : vector<8x16xf32>
    %cst_21 = arith.constant 1.000000e+00 : f32
    %39 = vector.broadcast %cst_21 : f32 to vector<8x16xf32>
    %40 = arith.addf %39, %38 : vector<8x16xf32>
    %cst_22 = arith.constant 5.000000e-01 : f32
    %41 = vector.broadcast %cst_22 : f32 to vector<8x16xf32>
    %42 = arith.mulf %41, %40 : vector<8x16xf32>
    %43 = math.cos %42 : vector<8x16xf32>
    %44 = math.sin %42 : vector<8x16xf32>
    %45 = tpu.iota {dimensions = array<i32: 1>} : vector<8x16xi32>
    %c1_i32 = arith.constant 1 : i32
    %46 = vector.broadcast %c1_i32 : i32 to vector<8x16xi32>
    %47 = arith.cmpi sge, %45, %46 : vector<8x16xi32>
    %c1_i32_23 = arith.constant 1 : i32
    %48 = tpu.dynamic_rotate %44 by %c1_i32_23 dim 1 : vector<8x16xf32>, i32 -> vector<8x16xf32>
    %cst_24 = arith.constant 1.000000e+00 : f32
    %49 = vector.broadcast %cst_24 : f32 to vector<8x16xf32>
    %50 = arith.select %47, %48, %49 : vector<8x16xi1>, vector<8x16xf32>
    %c1_i32_25 = arith.constant 1 : i32
    %51 = vector.broadcast %c1_i32_25 : i32 to vector<8x16xi32>
    %52 = arith.cmpi sge, %45, %51 : vector<8x16xi32>
    %c1_i32_26 = arith.constant 1 : i32
    %53 = tpu.dynamic_rotate %50 by %c1_i32_26 dim 1 : vector<8x16xf32>, i32 -> vector<8x16xf32>
    %cst_27 = arith.constant 1.000000e+00 : f32
    %54 = vector.broadcast %cst_27 : f32 to vector<8x16xf32>
    %55 = arith.select %52, %53, %54 : vector<8x16xi1>, vector<8x16xf32>
    %56 = arith.mulf %50, %55 : vector<8x16xf32>
    %c2_i32 = arith.constant 2 : i32
    %57 = vector.broadcast %c2_i32 : i32 to vector<8x16xi32>
    %58 = arith.cmpi sge, %45, %57 : vector<8x16xi32>
    %c2_i32_28 = arith.constant 2 : i32
    %59 = tpu.dynamic_rotate %56 by %c2_i32_28 dim 1 : vector<8x16xf32>, i32 -> vector<8x16xf32>
    %cst_29 = arith.constant 1.000000e+00 : f32
    %60 = vector.broadcast %cst_29 : f32 to vector<8x16xf32>
    %61 = arith.select %58, %59, %60 : vector<8x16xi1>, vector<8x16xf32>
    %62 = arith.mulf %56, %61 : vector<8x16xf32>
    %c4_i32 = arith.constant 4 : i32
    %63 = vector.broadcast %c4_i32 : i32 to vector<8x16xi32>
    %64 = arith.cmpi sge, %45, %63 : vector<8x16xi32>
    %c4_i32_30 = arith.constant 4 : i32
    %65 = tpu.dynamic_rotate %62 by %c4_i32_30 dim 1 : vector<8x16xf32>, i32 -> vector<8x16xf32>
    %cst_31 = arith.constant 1.000000e+00 : f32
    %66 = vector.broadcast %cst_31 : f32 to vector<8x16xf32>
    %67 = arith.select %64, %65, %66 : vector<8x16xi1>, vector<8x16xf32>
    %68 = arith.mulf %62, %67 : vector<8x16xf32>
    %c8_i32 = arith.constant 8 : i32
    %69 = vector.broadcast %c8_i32 : i32 to vector<8x16xi32>
    %70 = arith.cmpi sge, %45, %69 : vector<8x16xi32>
    %c8_i32_32 = arith.constant 8 : i32
    %71 = tpu.dynamic_rotate %68 by %c8_i32_32 dim 1 : vector<8x16xf32>, i32 -> vector<8x16xf32>
    %cst_33 = arith.constant 1.000000e+00 : f32
    %72 = vector.broadcast %cst_33 : f32 to vector<8x16xf32>
    %73 = arith.select %70, %71, %72 : vector<8x16xi1>, vector<8x16xf32>
    %74 = arith.mulf %68, %73 : vector<8x16xf32>
    %75 = arith.mulf %43, %74 : vector<8x16xf32>
    %c0_34 = arith.constant 0 : index
    %c0_35 = arith.constant 0 : index
    %76 = vector.load %arg6[%c0_34, %c0_35] : memref<8x17xf32, #tpu.memory_space<vmem>>, vector<8x16xf32>
    tpu.vector_store %arg6[%c0_34, %c0_35], %75 {strides = array<i32>} : memref<8x17xf32, #tpu.memory_space<vmem>>, vector<8x16xf32>,
    %77 = vector.extract_strided_slice %74 {offsets = [0, 15], sizes = [8, 1], strides = [1, 1]} : vector<8x16xf32> to vector<8x1xf32>
    %78 = vector.extract_strided_slice %44 {offsets = [0, 15], sizes = [8, 1], strides = [1, 1]} : vector<8x16xf32> to vector<8x1xf32>
    %79 = arith.mulf %77, %78 : vector<8x1xf32>
    %c0_36 = arith.constant 0 : index
    %c16 = arith.constant 16 : index
    %80 = vector.load %arg6[%c0_36, %c16] : memref<8x17xf32, #tpu.memory_space<vmem>>, vector<8x1xf32>
    tpu.vector_store %arg6[%c0_36, %c16], %79 {strides = array<i32>} : memref<8x17xf32, #tpu.memory_space<vmem>>, vector<8x1xf32>,
    return
  }
  func.func @transform_0(%arg0: i32) -> (i32, i32) {
    %c0_i32 = arith.constant 0 : i32
    %c0_i32_0 = arith.constant 0 : i32
    %c0_i32_1 = arith.constant 0 : i32
    return %c0_i32, %c0_i32_0 : i32, i32
  }
  func.func @transform_1(%arg0: i32) -> (i32, i32) {
    %c0_i32 = arith.constant 0 : i32
    %c0_i32_0 = arith.constant 0 : i32
    %c0_i32_1 = arith.constant 0 : i32
    return %c0_i32, %c0_i32_0 : i32, i32
  }
  func.func @transform_2(%arg0: i32) -> (i32, i32) {
    %c0_i32 = arith.constant 0 : i32
    %c0_i32_0 = arith.constant 0 : i32
    %c0_i32_1 = arith.constant 0 : i32
    return %c0_i32, %c0_i32_0 : i32, i32
  }
  func.func @transform_3(%arg0: i32) -> (i32, i32) {
    %c0_i32 = arith.constant 0 : i32
    %c0_i32_0 = arith.constant 0 : i32
    %c0_i32_1 = arith.constant 0 : i32
    return %c0_i32, %c0_i32_0 : i32, i32
  }
  func.func @transform_4(%arg0: i32) -> (i32, i32) {
    %c0_i32 = arith.constant 0 : i32
    %c0_i32_0 = arith.constant 0 : i32
    %c0_i32_1 = arith.constant 0 : i32
    return %c0_i32, %c0_i32_0 : i32, i32
  }
  func.func @transform_5(%arg0: i32) -> (i32, i32) {
    %c0_i32 = arith.constant 0 : i32
    %c0_i32_0 = arith.constant 0 : i32
    %c0_i32_1 = arith.constant 0 : i32
    return %c0_i32, %c0_i32_0 : i32, i32
  }
  func.func @transform_6(%arg0: i32) -> (i32, i32) {
    %c0_i32 = arith.constant 0 : i32
    %c0_i32_0 = arith.constant 0 : i32
    %c0_i32_1 = arith.constant 0 : i32
    return %c0_i32, %c0_i32_0 : i32, i32
  }
  func.func @transform_7(%arg0: i32) -> (i32, i32) {
    %c0_i32 = arith.constant 0 : i32
    %c0_i32_0 = arith.constant 0 : i32
    %c0_i32_1 = arith.constant 0 : i32
    return %c0_i32, %c0_i32_0 : i32, i32
  }
}

</mosaic_0001>

<llo_original>
// kernel: mul.1
$region0: #{mul.1}
  #allocation2 [shape = 's32[1]{0}', space=sflag, size = 0x4, scoped, tag = 'scoped memory for mul.1']
  %s0 = inlined_call_operand.vmem [shape: f32[1,16], index: 0, kind: input, shape index: {}]
  %s1 = inlined_call_operand.hbm [shape: f32[1,16], index: 1, kind: input, shape index: {}]
  %s2 = inlined_call_operand.vmem [shape: f32[1,16], index: 2, kind: output, shape index: {}]
  $region1: #{mul.1} parent=0
    #allocation0 [shape = 'u8[512]{0}', space=vmem, size = 0x400, scoped, tag = 'operand span for operand 1']
    #allocation1 [shape = 's32[1]{0}', space=sflag, size = 0x4, scoped, tag = 'scoped memory for mul.1']
    %3 = vsyncpa [#allocation1], 0
    %s5 = ssub.s32 16, 16
    %6 = vsyncadd [#allocation1], %s5
    %s8 = sshll.u32 [#allocation0], 4
    %s9 = int_to_ptr.vmem [resolvable:$true] %s8
    %11 = dma.hbm_to_vmem [thread:$0]  %s1, 16, %s9, [#allocation1]
    %12 = dma.done [#allocation1], 16
    %v13 = vld [vmem:[%s0] sm:$0x1]
    %v14 = vld [vmem:[#allocation0] sm:$0x1]
    %15 = xla_tuple %v13, %v14
    %16 = xla_tuple %15
    %v17 = vmul.f32 %v13, %v14
    %18 = xla_tuple %v17
    %19 = vst [vmem:[%s2] sm:$0x1] %v17
    %20 = vsyncpa [#allocation1], 1

// kernel: dae_layer_forward.1
$region0: #{dae_layer_forward.1}
  #allocation0 [shape = 'u32[]', space=smem, size = 0x4, offset = 0x4, fixed_abs, tag = 'smem constant byte address 0x4 - core index']
  #allocation1 [shape = 'u32[144,128]{1,0:T(1,128)}', space=vmem, size = 0x12000, scoped, tag = 'internal scratch']
  %s0 = inlined_call_operand.hbm [shape: f32[8,16], index: 0, kind: input, shape index: {}]
  %s1 = inlined_call_operand.vmem [shape: f32[1,16], index: 1, kind: input, shape index: {}]
  %s2 = inlined_call_operand.vmem [shape: f32[1,16], index: 2, kind: input, shape index: {}]
  %s3 = inlined_call_operand.vmem [shape: f32[1,16], index: 3, kind: input, shape index: {}]
  %s4 = inlined_call_operand.vmem [shape: f32[1,16], index: 4, kind: input, shape index: {}]
  %s5 = inlined_call_operand.hbm [shape: f32[8,17], index: 5, kind: output, shape index: {0}]
  %s6 = inlined_call_operand.hbm [shape: f32[1,16], index: 6, kind: output, shape index: {1}]
  %s7 = inlined_call_operand.hbm [shape: f32[1,16], index: 7, kind: output, shape index: {2}]
  %8 = xla_tuple %s5, %s6, %s7
  %s9 = sld [smem:[#allocation0]]
  $region50: #{dae_layer_forward.1} parent=0
    _
  %s11 = ssub.s32 1, %s9
  %s12 = scalar_select 0, %s11, %s9
  $region1: #{dae_layer_forward.1} parent=0
    #allocation2 [shape = 'u8[4096]{0}', space=vmem, size = 0x1000, scoped, tag = 'input window, operand 0, single buffered']
    #allocation3 [shape = 's32[1]{0}', space=sflag, size = 0x4, scoped, tag = 'scoped memory for dae_layer_forward.1']
    #allocation4 [shape = 's32[1]{0}', space=sflag, size = 0x4, scoped, tag = 'scoped memory for dae_layer_forward.1']
    #allocation5 [shape = 'u8[4096]{0}', space=vmem, size = 0x1000, scoped, tag = 'output window, operand 0, single buffered']
    #allocation6 [shape = 'u8[512]{0}', space=vmem, size = 0x400, scoped, tag = 'output window, operand 1, single buffered']
    #allocation7 [shape = 's32[1]{0}', space=sflag, size = 0x4, scoped, tag = 'scoped memory for dae_layer_forward.1']
    #allocation8 [shape = 'u8[512]{0}', space=vmem, size = 0x400, scoped, tag = 'output window, operand 2, single buffered']
    %13 = vsyncpa [#allocation3], 0
    %14 = vsyncpa [#allocation4], 0
    %15 = vsyncpa [#allocation7], 0
    // Predicated region
    $region2: #{dae_layer_forward.1} parent=1 // pred_check
      _
    $region3: #{dae_layer_forward.1} parent=1 // pred_check_branch
      %17 = sbr.rel (0) target = $region5
    $region4: #{dae_layer_forward.1} parent=1 // pred_region
      %s19 = ssub.s32 128, 128
      %20 = vsyncadd [#allocation3], %s19
      %s22 = sshll.u32 [#allocation2], 4
      %s23 = int_to_ptr.vmem [resolvable:$true] %s22
      %25 = dma.hbm_to_vmem [thread:$0]  %s0, 128, %s23, [#allocation3]
    $region5: #{dae_layer_forward.1} parent=1 // pred_fallthru
      _
    // Predicated region
    $region6: #{dae_layer_forward.1} parent=1 // pred_check
      _
    $region7: #{dae_layer_forward.1} parent=1 // pred_check_branch
      %27 = sbr.rel (0) target = $region9
    $region8: #{dae_layer_forward.1} parent=1 // pred_region
      _
    $region9: #{dae_layer_forward.1} parent=1 // pred_fallthru
      _
    // Predicated region
    $region10: #{dae_layer_forward.1} parent=1 // pred_check
      _
    $region11: #{dae_layer_forward.1} parent=1 // pred_check_branch
      %29 = sbr.rel (0) target = $region13
    $region12: #{dae_layer_forward.1} parent=1 // pred_region
      _
    $region13: #{dae_layer_forward.1} parent=1 // pred_fallthru
      _
    // Predicated region
    $region14: #{dae_layer_forward.1} parent=1 // pred_check
      _
    $region15: #{dae_layer_forward.1} parent=1 // pred_check_branch
      %31 = sbr.rel (0) target = $region17
    $region16: #{dae_layer_forward.1} parent=1 // pred_region
      _
    $region17: #{dae_layer_forward.1} parent=1 // pred_fallthru
      _
    // Predicated region
    $region18: #{dae_layer_forward.1} parent=1 // pred_check
      _
    $region19: #{dae_layer_forward.1} parent=1 // pred_check_branch
      %33 = sbr.rel (0) target = $region21
    $region20: #{dae_layer_forward.1} parent=1 // pred_region
      _
    $region21: #{dae_layer_forward.1} parent=1 // pred_fallthru
      _
    // Predicated region
    $region22: #{dae_layer_forward.1} parent=1 // pred_check
      _
    $region23: #{dae_layer_forward.1} parent=1 // pred_check_branch
      %35 = sbr.rel (0) target = $region25
    $region24: #{dae_layer_forward.1} parent=1 // pred_region
      %36 = dma.done [#allocation3], 128
    $region25: #{dae_layer_forward.1} parent=1 // pred_fallthru
      _
    %v37 = vld [vmem:[#allocation2] sm:$0xff]
    %vm38 = vcmask 130048
    %v39 = vsel %vm38, %v37, inf
    %v40 = vrot.slane %v39, 4
    %v41 = vmin.f32 %v39, %v40
    %v42 = vrot.slane %v41, 2
    %v43 = vmin.f32 %v41, %v42
    %v44 = vrot.slane %v43, 1
    %v45 = vmin.f32 %v43, %v44
    %v46 = vsel %vm38, %v37, -inf
    %v47 = vrot.slane %v46, 4
    %v48 = vmax.f32 %v46, %v47
    %v49 = vrot.slane %v48, 2
    %v50 = vmax.f32 %v48, %v49
    %v51 = vrot.slane %v50, 1
    %v52 = vmax.f32 %v50, %v51
    %v53 = vsub.f32 %v52, %v45
    %v54 = vld [vmem:[%s1] sm:$0x1]
    %v55 = vmul.f32 %v54, 0.99
    %v56 = vmul.f32 %v53, 0.01
    %v57 = vadd.f32 %v55, %v56
    %vm58 = vcmask 122880
    %59 = vst.msk [vmem:[#allocation6] sm:$0x1] %vm58, %v57
    %v60 = vld [vmem:[%s2] sm:$0x1]
    %v61 = vmul.f32 %v60, 0.99
    %v62 = vmul.f32 %v45, 0.01
    %v63 = vadd.f32 %v61, %v62
    %64 = vst.msk [vmem:[#allocation8] sm:$0x1] %vm58, %v63
    %v65 = vld [vmem:[%s3] sm:$0x1]
    %v66 = vadd.f32 %v53, 1e-05
    %v67 = vrcp.pop %v66
    %v68 = vmul.f32 %v65, %v67
    %v69 = vld [vmem:[%s4] sm:$0x1]
    %v70 = vmul.f32 %v68, %v45
    %v71 = vsub.f32 %v69, %v70
    %v73 = vlaneseq
    %v74 = vshrl.u32 %v73, 7
    %v75 = vsub.s32 0, %v74
    %v76 = vrot.slane %v68, %v75
    %v78 = vmul.f32 %v76, %v37
    %v80 = vlaneseq
    %v81 = vshrl.u32 %v80, 7
    %v82 = vsub.s32 0, %v81
    %v83 = vrot.slane %v71, %v82
    %v85 = vadd.f32 %v78, %v83
    %v86 = vmul.f32 %v85, 0.044715
    %v87 = vmul.f32 %v86, %v85
    %v88 = vmul.f32 %v87, %v85
    %v89 = vadd.f32 %v85, %v88
    %v90 = vmul.f32 %v89, 0.7978846
    %v91 = vtanh.pop %v90
    %v92 = vadd.f32 %v91, 1.0
    %v93 = vmul.f32 %v92, 0.5
    %v94 = vand.u32 2147483647, %v93
    %vm95 = vcmp.le.f32.partialorder %v94, 0.7853982
    %vm96 = vcmp.lt.s32.totalorder %v93, 0
    %v97 = vand.u32 %v93, 2139095040
    %v98 = vshrl.u32 %v97, 23
    %v99 = vsub.s32 %v98, 127
    %v100 = vand.u32 2147483647, %v93
    %v101 = vand.u32 %v100, 8388607
    %v102 = vor.u32 %v101, 8388608
    %v103 = vsub.s32 0, %v102
    %v104 = vadd.s32 %v99, 1
    %vm105 = vcmp.gt.s32.totalorder %v104, 0
    %v106 = vsel %vm105, %v104, 0
    %v107 = vshrl.u32 %v106, 5
    %v108 = vand.u32 %v106, 31
    %v109 = vsub.s32 32, %v108
    %v110 = vshrl.u32 683565275, %v109
    %v111 = vshll.u32 683565275, %v108
    %v112 = vshrl.u32 2475754826, %v109
    %v113 = vor.u32 %v111, %v112
    %v114 = vshll.u32 2475754826, %v108
    %v115 = vshrl.u32 2131351028, %v109
    %v116 = vor.u32 %v114, %v115
    %v117 = vshll.u32 2131351028, %v108
    %v118 = vshrl.u32 2102212464, %v109
    %v119 = vor.u32 %v117, %v118
    %v120 = vshll.u32 2102212464, %v108
    %v121 = vshrl.u32 920167782, %v109
    %v122 = vor.u32 %v120, %v121
    %v123 = vshll.u32 920167782, %v108
    %v124 = vshrl.u32 1326507024, %v109
    %v125 = vor.u32 %v123, %v124
    %vm126 = vcmp.lt.s32.totalorder %v107, 1
    %vm127 = vcmp.lt.s32.totalorder %v107, 2
    %vm128 = vcmp.lt.s32.totalorder %v107, 3
    %vm129 = vcmp.lt.s32.totalorder %v107, 4
    %v130 = vsel %vm126, %v110, %v113
    %v131 = vsel %vm129, %v119, 2102212464
    %v132 = vsel %vm128, %v116, %v131
    %v133 = vsel %vm127, %v130, %v132
    %v134 = vsel %vm126, %v113, %v116
    %v135 = vsel %vm129, %v122, 920167782
    %v136 = vsel %vm128, %v119, %v135
    %v137 = vsel %vm127, %v134, %v136
    %v138 = vsel %vm126, %v116, %v119
    %v139 = vsel %vm129, %v125, 1326507024
    %v140 = vsel %vm128, %v122, %v139
    %v141 = vsel %vm127, %v138, %v140
    %v142 = vshll.u32 %v102, 8
    %v143 = vmul.u32.u64.compose %v142, %v141
    %v144 = vextract.low.u32 %v143
    %v145 = vextract.high.u32 %v143
    %v146 = vmul.u32.u64.compose %v142, %v137
    %v147 = vextract.low.u32 %v146
    %v148 = vextract.high.u32 %v146
    %v149 = vmul.u32 %v142, %v133
    %v150 = vadd.s32 %v145, %v147
    %vm151 = vc.u32 %v145, %v147
    %v152 = vadd.s32 %v148, 1
    %v153 = vsel %vm151, %v152, %v148
    %v154 = vadd.s32 %v149, %v153
    %v155 = vadd.s32 %v154, 536870912
    %v156 = vshrl.u32 %v155, 30
    %v157 = vshll.u32 %v156, 30
    %v158 = vsub.s32 %v154, %v157
    %vm159 = vcmp.lt.s32.totalorder %v158, 0
    %v160 = vsub.s32 0, %v158
    %v161 = vsel %vm159, %v160, %v158
    %v162 = vclz %v161
    %v163 = vsub.s32 %v162, 2
    %vm164 = vcmp.gt.s32.totalorder 0, %v163
    %v165 = vsel %vm164, 0, %v163
    %v166 = vsub.s32 32, %v165
    %v167 = vshll.u32 %v158, %v165
    %v168 = vshrl.u32 %v150, %v166
    %v169 = vor.u32 %v167, %v168
    %v170 = vsub.s32 4294967266, %v165
    %v171 = vadd.s32 %v170, 127
    %v172 = vshll.u32 %v171, 23
    %v173 = vor.u32 4788187, %v172
    %v174 = vand.u32 2147483647, %v173
    %v176 = vcvt.s32.f32 %v169
    %v177 = vmul.f32 %v176, %v174
    %v178 = vxor.u32 %v177, 2147483648
    %v179 = vsel %vm96, %v178, %v177
    %v180 = vsub.s32 4, %v156
    %v181 = vsel %vm96, %v180, %v156
    %v182 = vsel %vm95, %v93, %v179
    %v183 = vsel %vm95, 0, %v181
    %v184 = vcosq.f32.pop %v182
    %v185 = vsinq.f32.pop %v182
    %vm186 = vweird.f32 %v93
    %v187 = vand.u32 %v183, 3
    %vm188 = vcmp.lt.s32.totalorder %v187, 2
    %vm189 = vcmp.eq.s32.totalorder %v187, 0
    %v190 = vxor.u32 %v185, 2147483648
    %v191 = vsel %vm189, %v184, %v190
    %vm192 = vcmp.eq.s32.totalorder %v187, 2
    %v193 = vxor.u32 %v184, 2147483648
    %v194 = vsel %vm192, %v193, %v185
    %v195 = vsel %vm188, %v191, %v194
    %v196 = vsel %vm186, nan, %v195
    %v197 = vand.u32 2147483647, %v93
    %vm198 = vcmp.le.f32.partialorder %v197, 0.7853982
    %vm199 = vcmp.lt.s32.totalorder %v93, 0
    %v200 = vand.u32 %v93, 2139095040
    %v201 = vshrl.u32 %v200, 23
    %v202 = vsub.s32 %v201, 127
    %v203 = vand.u32 2147483647, %v93
    %v204 = vand.u32 %v203, 8388607
    %v205 = vor.u32 %v204, 8388608
    %v206 = vsub.s32 0, %v205
    %v207 = vadd.s32 %v202, 1
    %vm208 = vcmp.gt.s32.totalorder %v207, 0
    %v209 = vsel %vm208, %v207, 0
    %v210 = vshrl.u32 %v209, 5
    %v211 = vand.u32 %v209, 31
    %v212 = vsub.s32 32, %v211
    %v213 = vshrl.u32 683565275, %v212
    %v214 = vshll.u32 683565275, %v211
    %v215 = vshrl.u32 2475754826, %v212
    %v216 = vor.u32 %v214, %v215
    %v217 = vshll.u32 2475754826, %v211
    %v218 = vshrl.u32 2131351028, %v212
    %v219 = vor.u32 %v217, %v218
    %v220 = vshll.u32 2131351028, %v211
    %v221 = vshrl.u32 2102212464, %v212
    %v222 = vor.u32 %v220, %v221
    %v223 = vshll.u32 2102212464, %v211
    %v224 = vshrl.u32 920167782, %v212
    %v225 = vor.u32 %v223, %v224
    %v226 = vshll.u32 920167782, %v211
    %v227 = vshrl.u32 1326507024, %v212
    %v228 = vor.u32 %v226, %v227
    %vm229 = vcmp.lt.s32.totalorder %v210, 1
    %vm230 = vcmp.lt.s32.totalorder %v210, 2
    %vm231 = vcmp.lt.s32.totalorder %v210, 3
    %vm232 = vcmp.lt.s32.totalorder %v210, 4
    %v233 = vsel %vm229, %v213, %v216
    %v234 = vsel %vm232, %v222, 2102212464
    %v235 = vsel %vm231, %v219, %v234
    %v236 = vsel %vm230, %v233, %v235
    %v237 = vsel %vm229, %v216, %v219
    %v238 = vsel %vm232, %v225, 920167782
    %v239 = vsel %vm231, %v222, %v238
    %v240 = vsel %vm230, %v237, %v239
    %v241 = vsel %vm229, %v219, %v222
    %v242 = vsel %vm232, %v228, 1326507024
    %v243 = vsel %vm231, %v225, %v242
    %v244 = vsel %vm230, %v241, %v243
    %v245 = vshll.u32 %v205, 8
    %v246 = vmul.u32.u64.compose %v245, %v244
    %v247 = vextract.low.u32 %v246
    %v248 = vextract.high.u32 %v246
    %v249 = vmul.u32.u64.compose %v245, %v240
    %v250 = vextract.low.u32 %v249
    %v251 = vextract.high.u32 %v249
    %v252 = vmul.u32 %v245, %v236
    %v253 = vadd.s32 %v248, %v250
    %vm254 = vc.u32 %v248, %v250
    %v255 = vadd.s32 %v251, 1
    %v256 = vsel %vm254, %v255, %v251
    %v257 = vadd.s32 %v252, %v256
    %v258 = vadd.s32 %v257, 536870912
    %v259 = vshrl.u32 %v258, 30
    %v260 = vshll.u32 %v259, 30
    %v261 = vsub.s32 %v257, %v260
    %vm262 = vcmp.lt.s32.totalorder %v261, 0
    %v263 = vsub.s32 0, %v261
    %v264 = vsel %vm262, %v263, %v261
    %v265 = vclz %v264
    %v266 = vsub.s32 %v265, 2
    %vm267 = vcmp.gt.s32.totalorder 0, %v266
    %v268 = vsel %vm267, 0, %v266
    %v269 = vsub.s32 32, %v268
    %v270 = vshll.u32 %v261, %v268
    %v271 = vshrl.u32 %v253, %v269
    %v272 = vor.u32 %v270, %v271
    %v273 = vsub.s32 4294967266, %v268
    %v274 = vadd.s32 %v273, 127
    %v275 = vshll.u32 %v274, 23
    %v276 = vor.u32 4788187, %v275
    %v277 = vand.u32 2147483647, %v276
    %v279 = vcvt.s32.f32 %v272
    %v280 = vmul.f32 %v279, %v277
    %v281 = vxor.u32 %v280, 2147483648
    %v282 = vsel %vm199, %v281, %v280
    %v283 = vsub.s32 4, %v259
    %v284 = vsel %vm199, %v283, %v259
    %v285 = vsel %vm198, %v93, %v282
    %v286 = vsel %vm198, 0, %v284
    %v287 = vcosq.f32.pop %v285
    %v288 = vsinq.f32.pop %v285
    %vm289 = vweird.f32 %v93
    %v290 = vadd.s32 %v286, 3
    %v291 = vand.u32 %v290, 3
    %vm292 = vcmp.lt.s32.totalorder %v291, 2
    %vm293 = vcmp.eq.s32.totalorder %v291, 0
    %v294 = vxor.u32 %v288, 2147483648
    %v295 = vsel %vm293, %v287, %v294
    %vm296 = vcmp.eq.s32.totalorder %v291, 2
    %v297 = vxor.u32 %v287, 2147483648
    %v298 = vsel %vm296, %v297, %v288
    %v299 = vsel %vm292, %v295, %v298
    %v300 = vsel %vm289, nan, %v299
    %v301 = vlaneseq
    %v302 = vand.u32 %v301, 127
    %vm303 = vcmp.ge.s32.totalorder %v302, 1
    %vm304 = vcmask 1047680
    %305 = vrot.lane.b32.xlu0 %v300, 16
    %v306 = vpop.permute.xlu0 %305
    %v307 = vsel %vm304, %v306, %v300
    %308 = vrot.lane.b32.xlu0 %v307, 16
    %v309 = vpop.permute.xlu0 %308
    %v310 = vsel %vm304, %v309, %v300
    %312 = vrot.lane.b32.xlu0 %v310, 113
    %v313 = vpop.permute.xlu0 %312
    %v315 = vsel %vm303, %v313, 1.0
    %316 = vrot.lane.b32.xlu0 %v315, 16
    %v317 = vpop.permute.xlu0 %316
    %v318 = vsel %vm304, %v317, %v315
    %319 = vrot.lane.b32.xlu0 %v318, 16
    %v320 = vpop.permute.xlu0 %319
    %v321 = vsel %vm304, %v320, %v315
    %323 = vrot.lane.b32.xlu0 %v321, 113
    %v324 = vpop.permute.xlu0 %323
    %v326 = vsel %vm303, %v324, 1.0
    %v327 = vmul.f32 %v315, %v326
    %vm328 = vcmp.ge.s32.totalorder %v302, 2
    %329 = vrot.lane.b32.xlu0 %v327, 16
    %v330 = vpop.permute.xlu0 %329
    %v331 = vsel %vm304, %v330, %v327
    %332 = vrot.lane.b32.xlu0 %v331, 16
    %v333 = vpop.permute.xlu0 %332
    %v334 = vsel %vm304, %v333, %v327
    %336 = vrot.lane.b32.xlu0 %v334, 114
    %v337 = vpop.permute.xlu0 %336
    %v339 = vsel %vm328, %v337, 1.0
    %v340 = vmul.f32 %v327, %v339
    %vm341 = vcmp.ge.s32.totalorder %v302, 4
    %342 = vrot.lane.b32.xlu0 %v340, 16
    %v343 = vpop.permute.xlu0 %342
    %v344 = vsel %vm304, %v343, %v340
    %345 = vrot.lane.b32.xlu0 %v344, 16
    %v346 = vpop.permute.xlu0 %345
    %v347 = vsel %vm304, %v346, %v340
    %349 = vrot.lane.b32.xlu0 %v347, 116
    %v350 = vpop.permute.xlu0 %349
    %v352 = vsel %vm341, %v350, 1.0
    %v353 = vmul.f32 %v340, %v352
    %vm354 = vcmp.ge.s32.totalorder %v302, 8
    %355 = vrot.lane.b32.xlu0 %v353, 16
    %v356 = vpop.permute.xlu0 %355
    %v357 = vsel %vm304, %v356, %v353
    %358 = vrot.lane.b32.xlu0 %v357, 16
    %v359 = vpop.permute.xlu0 %358
    %v360 = vsel %vm304, %v359, %v353
    %362 = vrot.lane.b32.xlu0 %v360, 120
    %v363 = vpop.permute.xlu0 %362
    %v365 = vsel %vm354, %v363, 1.0
    %v366 = vmul.f32 %v353, %v365
    %v367 = vmul.f32 %v196, %v366
    %368 = vst.msk [vmem:[#allocation5] sm:$0xff] %vm38, %v367
    %v369 = vmul.f32 %v366, %v300
    %371 = vrot.lane.b32.xlu0 %v369, 1
    %v372 = vpop.permute.xlu0 %371
    %vm374 = vcmask 138368
    %375 = vst.msk [vmem:[#allocation5] sm:$0xff] %vm374, %v372
    // Predicated region
    $region26: #{dae_layer_forward.1} parent=1 // pred_check
      _
    $region27: #{dae_layer_forward.1} parent=1 // pred_check_branch
      %377 = sbr.rel (0) target = $region29
    $region28: #{dae_layer_forward.1} parent=1 // pred_region
      %s379 = ssub.s32 128, 128
      %380 = vsyncadd [#allocation4], %s379
      %s382 = sshll.u32 [#allocation5], 4
      %s383 = int_to_ptr.vmem [resolvable:$true] %s382
      %385 = dma.vmem_to_hbm [thread:$0]  %s383, 128, %s5, [#allocation4]
    $region29: #{dae_layer_forward.1} parent=1 // pred_fallthru
      _
    // Predicated region
    $region30: #{dae_layer_forward.1} parent=1 // pred_check
      _
    $region31: #{dae_layer_forward.1} parent=1 // pred_check_branch
      %387 = sbr.rel (0) target = $region33
    $region32: #{dae_layer_forward.1} parent=1 // pred_region
      %s389 = ssub.s32 16, 16
      %390 = vsyncadd [#allocation7], %s389
      %s392 = sshll.u32 [#allocation6], 4
      %s393 = int_to_ptr.vmem [resolvable:$true] %s392
      %395 = dma.vmem_to_hbm [thread:$0]  %s393, 16, %s6, [#allocation7]
    $region33: #{dae_layer_forward.1} parent=1 // pred_fallthru
      _
    // Predicated region
    $region34: #{dae_layer_forward.1} parent=1 // pred_check
      _
    $region35: #{dae_layer_forward.1} parent=1 // pred_check_branch
      %397 = sbr.rel (0) target = $region37
    $region36: #{dae_layer_forward.1} parent=1 // pred_region
      %s399 = ssub.s32 16, 16
      %400 = vsyncadd [#allocation7], %s399
      %s402 = sshll.u32 [#allocation8], 4
      %s403 = int_to_ptr.vmem [resolvable:$true] %s402
      %405 = dma.vmem_to_hbm [thread:$0]  %s403, 16, %s7, [#allocation7]
    $region37: #{dae_layer_forward.1} parent=1 // pred_fallthru
      _
    // Predicated region
    $region38: #{dae_layer_forward.1} parent=1 // pred_check
      _
    $region39: #{dae_layer_forward.1} parent=1 // pred_check_branch
      %407 = sbr.rel (0) target = $region41
    $region40: #{dae_layer_forward.1} parent=1 // pred_region
      %408 = dma.done [#allocation4], 128
    $region41: #{dae_layer_forward.1} parent=1 // pred_fallthru
      _
    // Predicated region
    $region42: #{dae_layer_forward.1} parent=1 // pred_check
      _
    $region43: #{dae_layer_forward.1} parent=1 // pred_check_branch
      %410 = sbr.rel (0) target = $region45
    $region44: #{dae_layer_forward.1} parent=1 // pred_region
      %411 = dma.done [#allocation7], 16
    $region45: #{dae_layer_forward.1} parent=1 // pred_fallthru
      _
    // Predicated region
    $region46: #{dae_layer_forward.1} parent=1 // pred_check
      _
    $region47: #{dae_layer_forward.1} parent=1 // pred_check_branch
      %413 = sbr.rel (0) target = $region49
    $region48: #{dae_layer_forward.1} parent=1 // pred_region
      %414 = dma.done [#allocation7], 16
    $region49: #{dae_layer_forward.1} parent=1 // pred_fallthru
      _
    %415 = vsyncpa [#allocation3], 1
    %416 = vsyncpa [#allocation4], 1
    %417 = vsyncpa [#allocation7], 1

</llo_original>
